<compile_context>
chip_gen: v6e
topology: v6e:2x2x1
jax: 0.10.0
libtpu: 0.0.40
codegen_flags: <defaults>
</compile_context>

<pallas_src>
import functools

import jax
import jax.numpy as jnp
from jax.experimental import pallas as pl
from jax.experimental.pallas import tpu as pltpu


def _round_up(x, m):
    return ((x + m - 1) // m) * m


def _cls_head_kernel(nl_ref, pl_ref, w1a_ref, w1b_ref, w1c_ref,
                     b1_ref, w2_ref, b2_ref, out_ref):
    nl = nl_ref[...]                     # [TB, F]   (f32 or bf16)
    plh = pl_ref[...]                    # [TB, F]

    # fuse = cat([nl*pl, nl, pl]) @ W1  ==  (nl*pl)@W1a + nl@W1b + pl@W1c
    multi = nl * plh
    h = jnp.dot(multi, w1a_ref[...], preferred_element_type=jnp.float32)
    h = h + jnp.dot(nl, w1b_ref[...], preferred_element_type=jnp.float32)
    h = h + jnp.dot(plh, w1c_ref[...], preferred_element_type=jnp.float32)
    h = h + b1_ref[...]                  # bias kept f32, added once per tile

    # sigmoid + dropout(0.2)
    # TODO(synk): dropout is identity here (eval-mode semantics); training-mode
    # dropout would need pltpu.prng_seed / prng_random_bits masking.
    s = jax.nn.sigmoid(h)                # f32, EUP path

    # output_layer: Linear(2F -> 2), padded to 128 lanes for a lane-dense store.
    logits = jnp.dot(s.astype(w2_ref.dtype), w2_ref[...],
                     preferred_element_type=jnp.float32) + b2_ref[...]
    out_ref[...] = logits.astype(out_ref.dtype)


def classify_header7(nl_hidden, pl_hidden, w_dense, b_dense, w_out, b_out,
                     *, block_b=512, compute_dtype=jnp.float32):
    """Pallas implementation of classifyHeader7.forward (eval mode).

    nl_hidden, pl_hidden: [B, F]
    w_dense: [3F, 2F] ([in, out] layout), b_dense: [1, 2F]
    w_out:   [2F, 2],                     b_out:   [1, 2]
    Returns logits [B, 2] in float32.
    """
    B, F = nl_hidden.shape
    assert pl_hidden.shape == (B, F)
    d_out = w_dense.shape[1]                       # 2F
    assert w_dense.shape == (3 * F, d_out)

    # --- Split dense weight along K so the kernel never concatenates. -------
    w1a = w_dense[0 * F:1 * F].astype(compute_dtype)   # multiplies (nl*pl)
    w1b = w_dense[1 * F:2 * F].astype(compute_dtype)   # multiplies nl
    w1c = w_dense[2 * F:3 * F].astype(compute_dtype)   # multiplies pl
    b1 = b_dense.reshape(1, d_out).astype(jnp.float32)

    # --- Pad the 2-wide output projection to 128 lanes (zero columns). ------
    N_PAD = 128
    w2p = jnp.zeros((d_out, N_PAD), compute_dtype).at[:, :2].set(
        w_out.astype(compute_dtype))
    b2p = jnp.zeros((1, N_PAD), jnp.float32).at[:, :2].set(
        b_out.reshape(1, 2).astype(jnp.float32))

    # --- Batch tiling: TB multiple of 8; pad B so the grid divides evenly. --
    TB = int(min(block_b, _round_up(B, 8)))
    B_pad = _round_up(B, TB)
    nl_p = nl_hidden.astype(compute_dtype)
    pl_p = pl_hidden.astype(compute_dtype)
    if B_pad != B:
        pad = ((0, B_pad - B), (0, 0))
        nl_p = jnp.pad(nl_p, pad)
        pl_p = jnp.pad(pl_p, pad)

    # --- VMEM budget: weights (resident) + double-buffered input/output tiles.
    cbytes = jnp.dtype(compute_dtype).itemsize
    weight_bytes = (3 * F * d_out + d_out * N_PAD) * cbytes + (d_out + N_PAD) * 4
    tile_bytes = 2 * (2 * TB * F * cbytes) + 2 * TB * N_PAD * 4
    vmem_limit = min(100 * 1024 * 1024,
                     max(32 * 1024 * 1024, int(2.2 * (weight_bytes + tile_bytes))))

    grid_spec = pltpu.PrefetchScalarGridSpec(
        num_scalar_prefetch=0,
        grid=(B_pad // TB,),
        in_specs=[
            pl.BlockSpec((TB, F), lambda i: (i, 0)),        # nl tile
            pl.BlockSpec((TB, F), lambda i: (i, 0)),        # pl tile
            pl.BlockSpec((F, d_out), lambda i: (0, 0)),     # W1a (resident)
            pl.BlockSpec((F, d_out), lambda i: (0, 0)),     # W1b (resident)
            pl.BlockSpec((F, d_out), lambda i: (0, 0)),     # W1c (resident)
            pl.BlockSpec((1, d_out), lambda i: (0, 0)),     # b1  (resident)
            pl.BlockSpec((d_out, N_PAD), lambda i: (0, 0)), # W2  (resident)
            pl.BlockSpec((1, N_PAD), lambda i: (0, 0)),     # b2  (resident)
        ],
        out_specs=pl.BlockSpec((TB, N_PAD), lambda i: (i, 0)),
    )
    out_padded = pl.pallas_call(
        _cls_head_kernel,
        out_shape=jax.ShapeDtypeStruct((B_pad, N_PAD), jnp.float32),
        grid_spec=grid_spec,
        compiler_params=pltpu.CompilerParams(
            dimension_semantics=("parallel",),    # batch axis -> both TCs on v7x
            vmem_limit_bytes=vmem_limit),
    )(nl_p, pl_p, w1a, w1b, w1c, b1, w2p, b2p)

    return out_padded[:B, :2]


def init_params(key, hidden_size, rnn_type="bi_gru"):
    """Init matching classifyHeader7 layer shapes; weights stored [in, out]."""
    bi = 2 if rnn_type == "bi_gru" else 1
    d_in1 = hidden_size * 3 * bi
    d_out1 = hidden_size * 2 * bi
    k1, k2, k3, k4 = jax.random.split(key, 4)
    bound1 = 1.0 / jnp.sqrt(float(d_in1))
    bound2 = 1.0 / jnp.sqrt(float(d_out1))
    return {
        "w_dense": jax.random.uniform(k1, (d_in1, d_out1), jnp.float32,
                                      -bound1, bound1),
        "b_dense": jax.random.uniform(k2, (1, d_out1), jnp.float32,
                                      -bound1, bound1),
        "w_out": jax.random.uniform(k3, (d_out1, 2), jnp.float32,
                                    -bound2, bound2),
        "b_out": jax.random.uniform(k4, (1, 2), jnp.float32,
                                    -bound2, bound2),
    }


if __name__ == "__main__":
    hidden_size = 32
    rnn_type = "bi_gru"
    bi = 2
    B = 2
    F = hidden_size * bi   # 64

    key = jax.random.PRNGKey(0)
    k_nl, k_pl, k_p = jax.random.split(key, 3)
    nl_hidden = jax.random.normal(k_nl, (B, F), jnp.float32)
    pl_hidden = jax.random.normal(k_pl, (B, F), jnp.float32)
    params = init_params(k_p, hidden_size, rnn_type)

    # f32 kernel path (jit so the wrapper's split/pad/cast fuse into one launch).
    run_f32 = jax.jit(functools.partial(classify_header7,
                                        compute_dtype=jnp.float32))
    logits = run_f32(nl_hidden, pl_hidden,
                     params["w_dense"], params["b_dense"],
                     params["w_out"], params["b_out"])
    jax.block_until_ready(logits)
    assert logits.shape == (B, 2)

    # Pure-JAX reference check.
    fuse = jnp.concatenate([nl_hidden * pl_hidden, nl_hidden, pl_hidden], axis=1)
    h_ref = fuse @ params["w_dense"] + params["b_dense"]
    ref_logits = jax.nn.sigmoid(h_ref) @ params["w_out"] + params["b_out"]
    assert jnp.allclose(logits, ref_logits, atol=1e-4, rtol=1e-4)

    # bf16 compute path (v6e/v7x fast path) — looser tolerance.
    run_bf16 = jax.jit(functools.partial(classify_header7,
                                         compute_dtype=jnp.bfloat16))
    logits_bf16 = run_bf16(nl_hidden, pl_hidden,
                           params["w_dense"], params["b_dense"],
                           params["w_out"], params["b_out"])
    jax.block_until_ready(logits_bf16)
    assert jnp.allclose(logits_bf16, ref_logits, atol=5e-2, rtol=5e-2)

    print("KERNEL_OK")
</pallas_src>

<mosaic_0001>
module attributes {stable_mosaic.version = 11 : i64} {
  func.func @_cls_head_kernel(%arg0: i32, %arg1: memref<8x64xf32, #tpu.memory_space<vmem>>, %arg2: memref<8x64xf32, #tpu.memory_space<vmem>>, %arg3: memref<64x128xf32, #tpu.memory_space<vmem>>, %arg4: memref<64x128xf32, #tpu.memory_space<vmem>>, %arg5: memref<64x128xf32, #tpu.memory_space<vmem>>, %arg6: memref<1x128xf32, #tpu.memory_space<vmem>>, %arg7: memref<128x128xf32, #tpu.memory_space<vmem>>, %arg8: memref<1x128xf32, #tpu.memory_space<vmem>>, %arg9: memref<8x128xf32, #tpu.memory_space<vmem>>) attributes {dimension_semantics = [#tpu.dimension_semantics<parallel>], iteration_bounds = array<i64: 1>, scalar_prefetch = 0 : i64, scratch_operands = 0 : i64, tpu.core_type = #tpu.core_type<tc>, window_params = [{transform_indices = @transform_0, window_bounds = array<i64: 8, 64>}, {transform_indices = @transform_1, window_bounds = array<i64: 8, 64>}, {pipeline_mode = #tpu.pipeline_mode<synchronous>, transform_indices = @transform_2, window_bounds = array<i64: 64, 128>}, {pipeline_mode = #tpu.pipeline_mode<synchronous>, transform_indices = @transform_3, window_bounds = array<i64: 64, 128>}, {pipeline_mode = #tpu.pipeline_mode<synchronous>, transform_indices = @transform_4, window_bounds = array<i64: 64, 128>}, {pipeline_mode = #tpu.pipeline_mode<synchronous>, transform_indices = @transform_5, window_bounds = array<i64: 1, 128>}, {pipeline_mode = #tpu.pipeline_mode<synchronous>, transform_indices = @transform_6, window_bounds = array<i64: 128, 128>}, {pipeline_mode = #tpu.pipeline_mode<synchronous>, transform_indices = @transform_7, window_bounds = array<i64: 1, 128>}, {transform_indices = @transform_8, window_bounds = array<i64: 8, 128>}]} {
    %c0 = arith.constant 0 : index
    %c0_0 = arith.constant 0 : index
    %0 = vector.load %arg1[%c0, %c0_0] : memref<8x64xf32, #tpu.memory_space<vmem>>, vector<8x64xf32>
    %c0_1 = arith.constant 0 : index
    %c0_2 = arith.constant 0 : index
    %1 = vector.load %arg2[%c0_1, %c0_2] : memref<8x64xf32, #tpu.memory_space<vmem>>, vector<8x64xf32>
    %2 = arith.mulf %0, %1 : vector<8x64xf32>
    %c0_3 = arith.constant 0 : index
    %c0_4 = arith.constant 0 : index
    %3 = vector.load %arg3[%c0_3, %c0_4] : memref<64x128xf32, #tpu.memory_space<vmem>>, vector<64x128xf32>
    %cst = arith.constant dense<0.000000e+00> : vector<8x128xf32>
    %4 = tpu.matmul %2, %3, %cst {dimension_numbers = #tpu.dot_dimension_numbers<[1], [0], [0], [1], [0, 0, 1, 1], [], []>} : vector<8x64xf32>, vector<64x128xf32>, vector<8x128xf32> -> vector<8x128xf32>
    %c0_5 = arith.constant 0 : index
    %c0_6 = arith.constant 0 : index
    %5 = vector.load %arg4[%c0_5, %c0_6] : memref<64x128xf32, #tpu.memory_space<vmem>>, vector<64x128xf32>
    %cst_7 = arith.constant dense<0.000000e+00> : vector<8x128xf32>
    %6 = tpu.matmul %0, %5, %cst_7 {dimension_numbers = #tpu.dot_dimension_numbers<[1], [0], [0], [1], [0, 0, 1, 1], [], []>} : vector<8x64xf32>, vector<64x128xf32>, vector<8x128xf32> -> vector<8x128xf32>
    %7 = arith.addf %4, %6 : vector<8x128xf32>
    %c0_8 = arith.constant 0 : index
    %c0_9 = arith.constant 0 : index
    %8 = vector.load %arg5[%c0_8, %c0_9] : memref<64x128xf32, #tpu.memory_space<vmem>>, vector<64x128xf32>
    %cst_10 = arith.constant dense<0.000000e+00> : vector<8x128xf32>
    %9 = tpu.matmul %1, %8, %cst_10 {dimension_numbers = #tpu.dot_dimension_numbers<[1], [0], [0], [1], [0, 0, 1, 1], [], []>} : vector<8x64xf32>, vector<64x128xf32>, vector<8x128xf32> -> vector<8x128xf32>
    %10 = arith.addf %7, %9 : vector<8x128xf32>
    %c0_11 = arith.constant 0 : index
    %c0_12 = arith.constant 0 : index
    %11 = vector.load %arg6[%c0_11, %c0_12] : memref<1x128xf32, #tpu.memory_space<vmem>>, vector<1x128xf32>
    %12 = vector.broadcast %11 : vector<1x128xf32> to vector<8x128xf32>
    %13 = arith.addf %10, %12 : vector<8x128xf32>
    %14 = arith.negf %13 : vector<8x128xf32>
    %15 = math.exp %14 : vector<8x128xf32>
    %cst_13 = arith.constant 1.000000e+00 : f32
    %16 = vector.broadcast %cst_13 : f32 to vector<8x128xf32>
    %17 = arith.addf %16, %15 : vector<8x128xf32>
    %18 = arith.divf %16, %17 : vector<8x128xf32>
    %c0_14 = arith.constant 0 : index
    %c0_15 = arith.constant 0 : index
    %19 = vector.load %arg7[%c0_14, %c0_15] : memref<128x128xf32, #tpu.memory_space<vmem>>, vector<128x128xf32>
    %cst_16 = arith.constant dense<0.000000e+00> : vector<8x128xf32>
    %20 = tpu.matmul %18, %19, %cst_16 {dimension_numbers = #tpu.dot_dimension_numbers<[1], [0], [0], [1], [0, 0, 1, 1], [], []>} : vector<8x128xf32>, vector<128x128xf32>, vector<8x128xf32> -> vector<8x128xf32>
    %c0_17 = arith.constant 0 : index
    %c0_18 = arith.constant 0 : index
    %21 = vector.load %arg8[%c0_17, %c0_18] : memref<1x128xf32, #tpu.memory_space<vmem>>, vector<1x128xf32>
    %22 = vector.broadcast %21 : vector<1x128xf32> to vector<8x128xf32>
    %23 = arith.addf %20, %22 : vector<8x128xf32>
    %c0_19 = arith.constant 0 : index
    %c0_20 = arith.constant 0 : index
    %24 = vector.load %arg9[%c0_19, %c0_20] : memref<8x128xf32, #tpu.memory_space<vmem>>, vector<8x128xf32>
    tpu.vector_store %arg9[%c0_19, %c0_20], %23 {strides = array<i32>} : memref<8x128xf32, #tpu.memory_space<vmem>>, vector<8x128xf32>,
    return
  }
  func.func @transform_0(%arg0: i32) -> (i32, i32) {
    %c0_i32 = arith.constant 0 : i32
    %c0_i32_0 = arith.constant 0 : i32
    return %arg0, %c0_i32 : i32, i32
  }
  func.func @transform_1(%arg0: i32) -> (i32, i32) {
    %c0_i32 = arith.constant 0 : i32
    %c0_i32_0 = arith.constant 0 : i32
    return %arg0, %c0_i32 : i32, i32
  }
  func.func @transform_2(%arg0: i32) -> (i32, i32) {
    %c0_i32 = arith.constant 0 : i32
    %c0_i32_0 = arith.constant 0 : i32
    %c0_i32_1 = arith.constant 0 : i32
    return %c0_i32, %c0_i32_0 : i32, i32
  }
  func.func @transform_3(%arg0: i32) -> (i32, i32) {
    %c0_i32 = arith.constant 0 : i32
    %c0_i32_0 = arith.constant 0 : i32
    %c0_i32_1 = arith.constant 0 : i32
    return %c0_i32, %c0_i32_0 : i32, i32
  }
  func.func @transform_4(%arg0: i32) -> (i32, i32) {
    %c0_i32 = arith.constant 0 : i32
    %c0_i32_0 = arith.constant 0 : i32
    %c0_i32_1 = arith.constant 0 : i32
    return %c0_i32, %c0_i32_0 : i32, i32
  }
  func.func @transform_5(%arg0: i32) -> (i32, i32) {
    %c0_i32 = arith.constant 0 : i32
    %c0_i32_0 = arith.constant 0 : i32
    %c0_i32_1 = arith.constant 0 : i32
    return %c0_i32, %c0_i32_0 : i32, i32
  }
  func.func @transform_6(%arg0: i32) -> (i32, i32) {
    %c0_i32 = arith.constant 0 : i32
    %c0_i32_0 = arith.constant 0 : i32
    %c0_i32_1 = arith.constant 0 : i32
    return %c0_i32, %c0_i32_0 : i32, i32
  }
  func.func @transform_7(%arg0: i32) -> (i32, i32) {
    %c0_i32 = arith.constant 0 : i32
    %c0_i32_0 = arith.constant 0 : i32
    %c0_i32_1 = arith.constant 0 : i32
    return %c0_i32, %c0_i32_0 : i32, i32
  }
  func.func @transform_8(%arg0: i32) -> (i32, i32) {
    %c0_i32 = arith.constant 0 : i32
    %c0_i32_0 = arith.constant 0 : i32
    return %arg0, %c0_i32 : i32, i32
  }
}

</mosaic_0001>

<llo_original>
// kernel: classify_header7.1
$region0: #{classify_header7.1}
  #allocation0 [shape = 'u32[]', space=smem, size = 0x4, offset = 0x4, fixed_abs, tag = 'smem constant byte address 0x4 - core index']
  #allocation1 [shape = 'u32[144,128]{1,0:T(1,128)}', space=vmem, size = 0x12000, scoped, tag = 'internal scratch']
  %s0 = inlined_call_operand.vmem [shape: f32[8,64], index: 0, kind: input, shape index: {}]
  %s1 = inlined_call_operand.vmem [shape: f32[8,64], index: 1, kind: input, shape index: {}]
  %s2 = inlined_call_operand.vmem [shape: f32[64,128], index: 2, kind: input, shape index: {}]
  %s3 = inlined_call_operand.vmem [shape: f32[64,128], index: 3, kind: input, shape index: {}]
  %s4 = inlined_call_operand.vmem [shape: f32[64,128], index: 4, kind: input, shape index: {}]
  %s5 = inlined_call_operand.vmem [shape: f32[1,128], index: 5, kind: input, shape index: {}]
  %s6 = inlined_call_operand.vmem [shape: f32[128,128], index: 6, kind: input, shape index: {}]
  %s7 = inlined_call_operand.vmem [shape: f32[1,128], index: 7, kind: input, shape index: {}]
  %s8 = inlined_call_operand.vmem [shape: f32[8,128], index: 8, kind: output, shape index: {}]
  %s9 = sld [smem:[#allocation0]]
  $region42: #{classify_header7.1} parent=0
    _
  %s11 = ssub.s32 1, %s9
  %s12 = scalar_select 0, %s11, %s9
  // Predicated region
  $region2: #{classify_header7.1} parent=0 // pred_check
    _
  $region3: #{classify_header7.1} parent=0 // pred_check_branch
    %14 = sbr.rel (0) target = $region5
  $region4: #{classify_header7.1} parent=0 // pred_region
    _
  $region5: #{classify_header7.1} parent=0 // pred_fallthru
    _
  // Predicated region
  $region6: #{classify_header7.1} parent=0 // pred_check
    _
  $region7: #{classify_header7.1} parent=0 // pred_check_branch
    %16 = sbr.rel (0) target = $region9
  $region8: #{classify_header7.1} parent=0 // pred_region
    _
  $region9: #{classify_header7.1} parent=0 // pred_fallthru
    _
  // Predicated region
  $region10: #{classify_header7.1} parent=0 // pred_check
    _
  $region11: #{classify_header7.1} parent=0 // pred_check_branch
    %18 = sbr.rel (0) target = $region13
  $region12: #{classify_header7.1} parent=0 // pred_region
    _
  $region13: #{classify_header7.1} parent=0 // pred_fallthru
    _
  // Predicated region
  $region14: #{classify_header7.1} parent=0 // pred_check
    _
  $region15: #{classify_header7.1} parent=0 // pred_check_branch
    %20 = sbr.rel (0) target = $region17
  $region16: #{classify_header7.1} parent=0 // pred_region
    _
  $region17: #{classify_header7.1} parent=0 // pred_fallthru
    _
  // Predicated region
  $region18: #{classify_header7.1} parent=0 // pred_check
    _
  $region19: #{classify_header7.1} parent=0 // pred_check_branch
    %22 = sbr.rel (0) target = $region21
  $region20: #{classify_header7.1} parent=0 // pred_region
    _
  $region21: #{classify_header7.1} parent=0 // pred_fallthru
    _
  // Predicated region
  $region22: #{classify_header7.1} parent=0 // pred_check
    _
  $region23: #{classify_header7.1} parent=0 // pred_check_branch
    %24 = sbr.rel (0) target = $region25
  $region24: #{classify_header7.1} parent=0 // pred_region
    _
  $region25: #{classify_header7.1} parent=0 // pred_fallthru
    _
  // Predicated region
  $region26: #{classify_header7.1} parent=0 // pred_check
    _
  $region27: #{classify_header7.1} parent=0 // pred_check_branch
    %26 = sbr.rel (0) target = $region29
  $region28: #{classify_header7.1} parent=0 // pred_region
    _
  $region29: #{classify_header7.1} parent=0 // pred_fallthru
    _
  // Predicated region
  $region30: #{classify_header7.1} parent=0 // pred_check
    _
  $region31: #{classify_header7.1} parent=0 // pred_check_branch
    %28 = sbr.rel (0) target = $region33
  $region32: #{classify_header7.1} parent=0 // pred_region
    _
  $region33: #{classify_header7.1} parent=0 // pred_fallthru
    _
  %v29 = vld [vmem:[%s0] sm:$0xff]
  %v30 = vld [vmem:[%s1] sm:$0xff]
  %v31 = vmul.f32 %v29, %v30
  %v32 = vld [vmem:[%s2] sm:$0xff]
  %v33 = vld [vmem:[%s2 + $0x8] sm:$0xff]
  %v34 = vld [vmem:[%s2 + $0x10] sm:$0xff]
  %v35 = vld [vmem:[%s2 + $0x18] sm:$0xff]
  %v36 = vld [vmem:[%s2 + $0x20] sm:$0xff]
  %v37 = vld [vmem:[%s2 + $0x28] sm:$0xff]
  %v38 = vld [vmem:[%s2 + $0x30] sm:$0xff]
  %v39 = vld [vmem:[%s2 + $0x38] sm:$0xff]
  %v40 = vld [vmem:[%s3] sm:$0xff]
  %v41 = vld [vmem:[%s3 + $0x8] sm:$0xff]
  %v42 = vld [vmem:[%s3 + $0x10] sm:$0xff]
  %v43 = vld [vmem:[%s3 + $0x18] sm:$0xff]
  %v44 = vld [vmem:[%s3 + $0x20] sm:$0xff]
  %v45 = vld [vmem:[%s3 + $0x28] sm:$0xff]
  %v46 = vld [vmem:[%s3 + $0x30] sm:$0xff]
  %v47 = vld [vmem:[%s3 + $0x38] sm:$0xff]
  %vm48 = vcmask 523264
  %v50 = vsel %vm48, %v29, 0
  %52 = vmatprep.subr.mxu0 0.0
  %53 = vmatpush1.msra.mxu0 0.0
  %54 = vmatprep.subr.mxu0 0.0
  %55 = vmatpush1.msra.mxu0 0.0
  %56 = vmatprep.subr.mxu0 0.0
  %57 = vmatpush1.msra.mxu0 0.0
  %58 = vmatprep.subr.mxu0 0.0
  %59 = vmatpush1.msra.mxu0 0.0
  %60 = vmatprep.subr.mxu0 0.0
  %61 = vmatpush1.msra.mxu0 0.0
  %62 = vmatprep.subr.mxu0 0.0
  %63 = vmatpush1.msra.mxu0 0.0
  %64 = vmatprep.subr.mxu0 0.0
  %65 = vmatpush1.msra.mxu0 0.0
  %66 = vmatprep.subr.mxu0 0.0
  %67 = vmatpush1.msra.mxu0 0.0
  %68 = vmatprep.subr.mxu0 0.0
  %69 = vmatpush1.msra.mxu0 %v47
  %70 = vmatprep.subr.mxu0 0.0
  %71 = vmatpush1.msra.mxu0 %v46
  %72 = vmatprep.subr.mxu0 0.0
  %73 = vmatpush1.msra.mxu0 %v45
  %74 = vmatprep.subr.mxu0 0.0
  %75 = vmatpush1.msra.mxu0 %v44
  %76 = vmatprep.subr.mxu0 0.0
  %77 = vmatpush1.msra.mxu0 %v43
  %78 = vmatprep.subr.mxu0 0.0
  %79 = vmatpush1.msra.mxu0 %v42
  %80 = vmatprep.subr.mxu0 0.0
  %81 = vmatpush1.msra.mxu0 %v41
  %82 = vmatprep.subr.mxu0 0.0
  %83 = vmatpush1.msra.mxu0 %v40
  %84 = vmatprep.subr.mxu0 0.0
  %85 = vmatpush2.msra.mxu0 0.0
  %86 = vmatprep.subr.mxu0 0.0
  %87 = vmatpush2.msra.mxu0 0.0
  %88 = vmatprep.subr.mxu0 0.0
  %89 = vmatpush2.msra.mxu0 0.0
  %90 = vmatprep.subr.mxu0 0.0
  %91 = vmatpush2.msra.mxu0 0.0
  %92 = vmatprep.subr.mxu0 0.0
  %93 = vmatpush2.msra.mxu0 0.0
  %94 = vmatprep.subr.mxu0 0.0
  %95 = vmatpush2.msra.mxu0 0.0
  %96 = vmatprep.subr.mxu0 0.0
  %97 = vmatpush2.msra.mxu0 0.0
  %98 = vmatprep.subr.mxu0 0.0
  %99 = vmatpush2.msra.mxu0 0.0
  %100 = vmatprep.subr.mxu0 0.0
  %101 = vmatpush2.msra.mxu0 0.0
  %102 = vmatprep.subr.mxu0 0.0
  %103 = vmatpush2.msra.mxu0 0.0
  %104 = vmatprep.subr.mxu0 0.0
  %105 = vmatpush2.msra.mxu0 0.0
  %106 = vmatprep.subr.mxu0 0.0
  %107 = vmatpush2.msra.mxu0 0.0
  %108 = vmatprep.subr.mxu0 0.0
  %109 = vmatpush2.msra.mxu0 0.0
  %110 = vmatprep.subr.mxu0 0.0
  %111 = vmatpush2.msra.mxu0 0.0
  %112 = vmatprep.subr.mxu0 0.0
  %113 = vmatpush2.msra.mxu0 0.0
  %114 = vmatprep.subr.mxu0 0.0
  %115 = vmatpush2.msra.mxu0 0.0
  %116 = vmatprep.mubr.f32.mxu0 0.0
  %117 = vmatmul.mubr.f32.gmra.mxu0 %v50
  %v118 = vpop.f32.mrf.mxu0
  %v119 = vadd.f32 0.0, %v118
  %v120 = vpop.f32.mrf.mxu0
  %121 = vdwg.mxu0
  %v123 = vsel %vm48, %v31, 0
  %125 = vmatprep.subr.mxu0 0.0
  %126 = vmatpush1.msra.mxu0 0.0
  %127 = vmatprep.subr.mxu0 0.0
  %128 = vmatpush1.msra.mxu0 0.0
  %129 = vmatprep.subr.mxu0 0.0
  %130 = vmatpush1.msra.mxu0 0.0
  %131 = vmatprep.subr.mxu0 0.0
  %132 = vmatpush1.msra.mxu0 0.0
  %133 = vmatprep.subr.mxu0 0.0
  %134 = vmatpush1.msra.mxu0 0.0
  %135 = vmatprep.subr.mxu0 0.0
  %136 = vmatpush1.msra.mxu0 0.0
  %137 = vmatprep.subr.mxu0 0.0
  %138 = vmatpush1.msra.mxu0 0.0
  %139 = vmatprep.subr.mxu0 0.0
  %140 = vmatpush1.msra.mxu0 0.0
  %141 = vmatprep.subr.mxu0 0.0
  %142 = vmatpush1.msra.mxu0 %v39
  %143 = vmatprep.subr.mxu0 0.0
  %144 = vmatpush1.msra.mxu0 %v38
  %145 = vmatprep.subr.mxu0 0.0
  %146 = vmatpush1.msra.mxu0 %v37
  %147 = vmatprep.subr.mxu0 0.0
  %148 = vmatpush1.msra.mxu0 %v36
  %149 = vmatprep.subr.mxu0 0.0
  %150 = vmatpush1.msra.mxu0 %v35
  %151 = vmatprep.subr.mxu0 0.0
  %152 = vmatpush1.msra.mxu0 %v34
  %153 = vmatprep.subr.mxu0 0.0
  %154 = vmatpush1.msra.mxu0 %v33
  %155 = vmatprep.subr.mxu0 0.0
  %156 = vmatpush1.msra.mxu0 %v32
  %157 = vmatprep.subr.mxu0 0.0
  %158 = vmatpush2.msra.mxu0 0.0
  %159 = vmatprep.subr.mxu0 0.0
  %160 = vmatpush2.msra.mxu0 0.0
  %161 = vmatprep.subr.mxu0 0.0
  %162 = vmatpush2.msra.mxu0 0.0
  %163 = vmatprep.subr.mxu0 0.0
  %164 = vmatpush2.msra.mxu0 0.0
  %165 = vmatprep.subr.mxu0 0.0
  %166 = vmatpush2.msra.mxu0 0.0
  %167 = vmatprep.subr.mxu0 0.0
  %168 = vmatpush2.msra.mxu0 0.0
  %169 = vmatprep.subr.mxu0 0.0
  %170 = vmatpush2.msra.mxu0 0.0
  %171 = vmatprep.subr.mxu0 0.0
  %172 = vmatpush2.msra.mxu0 0.0
  %173 = vmatprep.subr.mxu0 0.0
  %174 = vmatpush2.msra.mxu0 0.0
  %175 = vmatprep.subr.mxu0 0.0
  %176 = vmatpush2.msra.mxu0 0.0
  %177 = vmatprep.subr.mxu0 0.0
  %178 = vmatpush2.msra.mxu0 0.0
  %179 = vmatprep.subr.mxu0 0.0
  %180 = vmatpush2.msra.mxu0 0.0
  %181 = vmatprep.subr.mxu0 0.0
  %182 = vmatpush2.msra.mxu0 0.0
  %183 = vmatprep.subr.mxu0 0.0
  %184 = vmatpush2.msra.mxu0 0.0
  %185 = vmatprep.subr.mxu0 0.0
  %186 = vmatpush2.msra.mxu0 0.0
  %187 = vmatprep.subr.mxu0 0.0
  %188 = vmatpush2.msra.mxu0 0.0
  %189 = vmatprep.mubr.f32.mxu0 0.0
  %190 = vmatmul.mubr.f32.gmra.mxu0 %v123
  %v191 = vpop.f32.mrf.mxu0
  %v192 = vadd.f32 %v119, %v191
  %v193 = vpop.f32.mrf.mxu0
  %194 = vdwg.mxu0
  %v195 = vld [vmem:[%s4] sm:$0xff]
  %v196 = vld [vmem:[%s4 + $0x8] sm:$0xff]
  %v197 = vld [vmem:[%s4 + $0x10] sm:$0xff]
  %v198 = vld [vmem:[%s4 + $0x18] sm:$0xff]
  %v199 = vld [vmem:[%s4 + $0x20] sm:$0xff]
  %v200 = vld [vmem:[%s4 + $0x28] sm:$0xff]
  %v201 = vld [vmem:[%s4 + $0x30] sm:$0xff]
  %v202 = vld [vmem:[%s4 + $0x38] sm:$0xff]
  %v204 = vsel %vm48, %v30, 0
  %206 = vmatprep.subr.mxu0 0.0
  %207 = vmatpush1.msra.mxu0 0.0
  %208 = vmatprep.subr.mxu0 0.0
  %209 = vmatpush1.msra.mxu0 0.0
  %210 = vmatprep.subr.mxu0 0.0
  %211 = vmatpush1.msra.mxu0 0.0
  %212 = vmatprep.subr.mxu0 0.0
  %213 = vmatpush1.msra.mxu0 0.0
  %214 = vmatprep.subr.mxu0 0.0
  %215 = vmatpush1.msra.mxu0 0.0
  %216 = vmatprep.subr.mxu0 0.0
  %217 = vmatpush1.msra.mxu0 0.0
  %218 = vmatprep.subr.mxu0 0.0
  %219 = vmatpush1.msra.mxu0 0.0
  %220 = vmatprep.subr.mxu0 0.0
  %221 = vmatpush1.msra.mxu0 0.0
  %222 = vmatprep.subr.mxu0 0.0
  %223 = vmatpush1.msra.mxu0 %v202
  %224 = vmatprep.subr.mxu0 0.0
  %225 = vmatpush1.msra.mxu0 %v201
  %226 = vmatprep.subr.mxu0 0.0
  %227 = vmatpush1.msra.mxu0 %v200
  %228 = vmatprep.subr.mxu0 0.0
  %229 = vmatpush1.msra.mxu0 %v199
  %230 = vmatprep.subr.mxu0 0.0
  %231 = vmatpush1.msra.mxu0 %v198
  %232 = vmatprep.subr.mxu0 0.0
  %233 = vmatpush1.msra.mxu0 %v197
  %234 = vmatprep.subr.mxu0 0.0
  %235 = vmatpush1.msra.mxu0 %v196
  %236 = vmatprep.subr.mxu0 0.0
  %237 = vmatpush1.msra.mxu0 %v195
  %238 = vmatprep.subr.mxu0 0.0
  %239 = vmatpush2.msra.mxu0 0.0
  %240 = vmatprep.subr.mxu0 0.0
  %241 = vmatpush2.msra.mxu0 0.0
  %242 = vmatprep.subr.mxu0 0.0
  %243 = vmatpush2.msra.mxu0 0.0
  %244 = vmatprep.subr.mxu0 0.0
  %245 = vmatpush2.msra.mxu0 0.0
  %246 = vmatprep.subr.mxu0 0.0
  %247 = vmatpush2.msra.mxu0 0.0
  %248 = vmatprep.subr.mxu0 0.0
  %249 = vmatpush2.msra.mxu0 0.0
  %250 = vmatprep.subr.mxu0 0.0
  %251 = vmatpush2.msra.mxu0 0.0
  %252 = vmatprep.subr.mxu0 0.0
  %253 = vmatpush2.msra.mxu0 0.0
  %254 = vmatprep.subr.mxu0 0.0
  %255 = vmatpush2.msra.mxu0 0.0
  %256 = vmatprep.subr.mxu0 0.0
  %257 = vmatpush2.msra.mxu0 0.0
  %258 = vmatprep.subr.mxu0 0.0
  %259 = vmatpush2.msra.mxu0 0.0
  %260 = vmatprep.subr.mxu0 0.0
  %261 = vmatpush2.msra.mxu0 0.0
  %262 = vmatprep.subr.mxu0 0.0
  %263 = vmatpush2.msra.mxu0 0.0
  %264 = vmatprep.subr.mxu0 0.0
  %265 = vmatpush2.msra.mxu0 0.0
  %266 = vmatprep.subr.mxu0 0.0
  %267 = vmatpush2.msra.mxu0 0.0
  %268 = vmatprep.subr.mxu0 0.0
  %269 = vmatpush2.msra.mxu0 0.0
  %270 = vmatprep.mubr.f32.mxu0 0.0
  %271 = vmatmul.mubr.f32.gmra.mxu0 %v204
  %v272 = vpop.f32.mrf.mxu0
  %v273 = vadd.f32 0.0, %v272
  %v274 = vpop.f32.mrf.mxu0
  %275 = vdwg.mxu0
  %v276 = vadd.f32 %v192, %v273
  %v277 = vld [vmem:[%s5] sm:$0x1]
  %v279 = vlaneseq
  %v280 = vshrl.u32 %v279, 7
  %v281 = vsub.s32 0, %v280
  %v282 = vrot.slane %v277, %v281
  %v284 = vadd.f32 %v276, %v282
  %v285 = vxor.u32 %v284, 2147483648
  %v286 = vmul.f32 %v285, 1.442695
  %v287 = vpow.pop %v286
  %v288 = vadd.f32 %v287, 1.0
  %v289 = vrcp.pop %v288
  %v290 = vmul.f32 1.0, %v289
  %v291 = vld [vmem:[%s6] sm:$0xff]
  %v292 = vld [vmem:[%s6 + $0x8] sm:$0xff]
  %v293 = vld [vmem:[%s6 + $0x10] sm:$0xff]
  %v294 = vld [vmem:[%s6 + $0x18] sm:$0xff]
  %v295 = vld [vmem:[%s6 + $0x20] sm:$0xff]
  %v296 = vld [vmem:[%s6 + $0x28] sm:$0xff]
  %v297 = vld [vmem:[%s6 + $0x30] sm:$0xff]
  %v298 = vld [vmem:[%s6 + $0x38] sm:$0xff]
  %v299 = vld [vmem:[%s6 + $0x40] sm:$0xff]
  %v300 = vld [vmem:[%s6 + $0x48] sm:$0xff]
  %v301 = vld [vmem:[%s6 + $0x50] sm:$0xff]
  %v302 = vld [vmem:[%s6 + $0x58] sm:$0xff]
  %v303 = vld [vmem:[%s6 + $0x60] sm:$0xff]
  %v304 = vld [vmem:[%s6 + $0x68] sm:$0xff]
  %v305 = vld [vmem:[%s6 + $0x70] sm:$0xff]
  %v306 = vld [vmem:[%s6 + $0x78] sm:$0xff]
  %v307 = vld [vmem:[%s7] sm:$0x1]
  %v309 = vlaneseq
  %v310 = vshrl.u32 %v309, 7
  %v311 = vsub.s32 0, %v310
  %v312 = vrot.slane %v307, %v311
  %314 = vmatprep.subr.mxu0 0.0
  %315 = vmatpush1.msra.mxu0 %v306
  %316 = vmatprep.subr.mxu0 0.0
  %317 = vmatpush1.msra.mxu0 %v305
  %318 = vmatprep.subr.mxu0 0.0
  %319 = vmatpush1.msra.mxu0 %v304
  %320 = vmatprep.subr.mxu0 0.0
  %321 = vmatpush1.msra.mxu0 %v303
  %322 = vmatprep.subr.mxu0 0.0
  %323 = vmatpush1.msra.mxu0 %v302
  %324 = vmatprep.subr.mxu0 0.0
  %325 = vmatpush1.msra.mxu0 %v301
  %326 = vmatprep.subr.mxu0 0.0
  %327 = vmatpush1.msra.mxu0 %v300
  %328 = vmatprep.subr.mxu0 0.0
  %329 = vmatpush1.msra.mxu0 %v299
  %330 = vmatprep.subr.mxu0 0.0
  %331 = vmatpush1.msra.mxu0 %v298
  %332 = vmatprep.subr.mxu0 0.0
  %333 = vmatpush1.msra.mxu0 %v297
  %334 = vmatprep.subr.mxu0 0.0
  %335 = vmatpush1.msra.mxu0 %v296
  %336 = vmatprep.subr.mxu0 0.0
  %337 = vmatpush1.msra.mxu0 %v295
  %338 = vmatprep.subr.mxu0 0.0
  %339 = vmatpush1.msra.mxu0 %v294
  %340 = vmatprep.subr.mxu0 0.0
  %341 = vmatpush1.msra.mxu0 %v293
  %342 = vmatprep.subr.mxu0 0.0
  %343 = vmatpush1.msra.mxu0 %v292
  %344 = vmatprep.subr.mxu0 0.0
  %345 = vmatpush1.msra.mxu0 %v291
  %346 = vmatprep.subr.mxu0 0.0
  %347 = vmatpush2.msra.mxu0 0.0
  %348 = vmatprep.subr.mxu0 0.0
  %349 = vmatpush2.msra.mxu0 0.0
  %350 = vmatprep.subr.mxu0 0.0
  %351 = vmatpush2.msra.mxu0 0.0
  %352 = vmatprep.subr.mxu0 0.0
  %353 = vmatpush2.msra.mxu0 0.0
  %354 = vmatprep.subr.mxu0 0.0
  %355 = vmatpush2.msra.mxu0 0.0
  %356 = vmatprep.subr.mxu0 0.0
  %357 = vmatpush2.msra.mxu0 0.0
  %358 = vmatprep.subr.mxu0 0.0
  %359 = vmatpush2.msra.mxu0 0.0
  %360 = vmatprep.subr.mxu0 0.0
  %361 = vmatpush2.msra.mxu0 0.0
  %362 = vmatprep.subr.mxu0 0.0
  %363 = vmatpush2.msra.mxu0 0.0
  %364 = vmatprep.subr.mxu0 0.0
  %365 = vmatpush2.msra.mxu0 0.0
  %366 = vmatprep.subr.mxu0 0.0
  %367 = vmatpush2.msra.mxu0 0.0
  %368 = vmatprep.subr.mxu0 0.0
  %369 = vmatpush2.msra.mxu0 0.0
  %370 = vmatprep.subr.mxu0 0.0
  %371 = vmatpush2.msra.mxu0 0.0
  %372 = vmatprep.subr.mxu0 0.0
  %373 = vmatpush2.msra.mxu0 0.0
  %374 = vmatprep.subr.mxu0 0.0
  %375 = vmatpush2.msra.mxu0 0.0
  %376 = vmatprep.subr.mxu0 0.0
  %377 = vmatpush2.msra.mxu0 0.0
  %378 = vmatprep.mubr.f32.mxu0 0.0
  %379 = vmatmul.mubr.f32.gmra.mxu0 %v290
  %v380 = vpop.f32.mrf.mxu0
  %v381 = vadd.f32 %v312, %v380
  %v382 = vpop.f32.mrf.mxu0
  %383 = vdwg.mxu0
  %384 = vst [vmem:[%s8] sm:$0xff] %v381
  // Predicated region
  $region34: #{classify_header7.1} parent=0 // pred_check
    _
  $region35: #{classify_header7.1} parent=0 // pred_check_branch
    %386 = sbr.rel (0) target = $region37
  $region36: #{classify_header7.1} parent=0 // pred_region
    _
  $region37: #{classify_header7.1} parent=0 // pred_fallthru
    _
  // Predicated region
  $region38: #{classify_header7.1} parent=0 // pred_check
    _
  $region39: #{classify_header7.1} parent=0 // pred_check_branch
    %388 = sbr.rel (0) target = $region41
  $region40: #{classify_header7.1} parent=0 // pred_region
    _
  $region41: #{classify_header7.1} parent=0 // pred_fallthru
    _

</llo_original>
